<compile_context>
chip_gen: v5e
topology: v5e:2x2
jax: 0.10.0
libtpu: 0.0.40
codegen_flags: <defaults>
</compile_context>

<pallas_src>
import functools

import jax
import jax.numpy as jnp
from jax import lax
from jax.experimental import pallas as pl
from jax.experimental.pallas import tpu as pltpu


def _model_kernel(x_ref, mask_ref, bmask_ref, w_ref, b_ref,
                  dec_ref, coded_ref, *, C, H, W):
    """TB samples per grid step; spatial dims folded to a lane-dense H*W axis.

    x_ref     : (TB, C, HW)  VMEM   input samples
    mask_ref  : (C, HW)      VMEM   shutter mask logits (resident across steps)
    bmask_ref : (9, HW)      VMEM   precomputed conv boundary masks (resident)
    w_ref     : (9*C,)       SMEM   conv taps, w_ref[t*C + co] = weight[co,0,t//3,t%3]
    b_ref     : (C,)         SMEM   conv bias
    dec_ref   : (TB, C*HW)   VMEM   decoder output (channel-major flattened)
    coded_ref : (TB, HW)     VMEM   coded measurement
    """
    HW = H * W

    # ---- shutter: coded = sum_c sigmoid(mask[c]) * x[c] (vectorized reduction) ----
    # TODO(synk): the PyTorch shutter's `train` flag (straight-through
    # binarization) is dropped; this matches eval-mode sigmoid gating.
    m = jax.nn.sigmoid(mask_ref[...])                      # (C, HW)   EUP (free slot)
    coded = jnp.sum(x_ref[...] * m[None, :, :], axis=1)    # (TB, HW)  sublane-dense
    coded_ref[...] = coded

    bm = bmask_ref[...]                                    # (9, HW) geometry masks

    # ---- decoder: 3x3 conv (1 -> C channels), padding=1 ----
    # Centre tap (dh=dw=0) needs neither roll nor mask; fold the bias there so
    # the C accumulators need no zero-init.
    accs = [coded * w_ref[4 * C + co] + b_ref[co] for co in range(C)]

    # Remaining 8 taps: tap-outer / channel-inner keeps only one shifted+masked
    # tap live at a time (C accumulators + 1 tap of vreg pressure).
    offsets = [(dh, dw) for dh in (-1, 0, 1) for dw in (-1, 0, 1)]
    for t, (dh, dw) in enumerate(offsets):
        if t == 4:                                         # centre tap already done
            continue
        s = dh * W + dw
        # shifted[i] = coded[i + s]  ->  roll by (-s) mod HW (jnp.roll semantics)
        tap = pltpu.roll(coded, shift=(-s) % HW, axis=1) * bm[t:t + 1]
        for co in range(C):
            accs[co] = accs[co] + tap * w_ref[t * C + co]

    # Lane-dense writeback: each channel is an aligned 128-multiple lane slice.
    for co in range(C):
        dec_ref[:, pl.ds(co * HW, HW)] = accs[co]


def model_forward(x, mask, weight, bias):
    """x: (N,C,H,W); mask: (C,H,W); weight: (C,1,3,3); bias: (C,). Returns (dec, coded)."""
    N, C, H, W = x.shape
    HW = H * W
    TB = min(N, 8)                      # f32 sublane depth; whole batch at small N
    G = pl.cdiv(N, TB)

    # Fold spatial dims so the trailing axis is lane-dense (256 here; multiple of
    # 128 at production sizes).  Row-major reshape is a layout no-op.
    x_f = x.astype(jnp.float32).reshape(N, C, HW)
    mask_f = mask.astype(jnp.float32).reshape(C, HW)

    # Flatten conv weight so w_flat[t*C + co] = weight[co, 0, t//3, t%3].
    w_flat = jnp.transpose(weight[:, 0].reshape(C, 9).astype(jnp.float32),
                           (1, 0)).reshape(-1)
    b_f = bias.astype(jnp.float32)

    # Geometry-only 3x3 boundary masks, hoisted out of the kernel body: data
    # independent, computed once, resident in VMEM across the whole grid.
    idx = jnp.arange(HW, dtype=jnp.int32)
    row, col = idx // W, idx % W
    bmask = jnp.stack(
        [((row + dh >= 0) & (row + dh < H) & (col + dw >= 0) & (col + dw < W))
         .astype(jnp.float32)
         for dh in (-1, 0, 1) for dw in (-1, 0, 1)],
        axis=0)                                            # (9, HW)

    kernel = functools.partial(_model_kernel, C=C, H=H, W=W)
    smem = pl.BlockSpec(memory_space=pltpu.MemorySpace.SMEM)

    # Memory-bound kernel (~2 flop/byte): advisory cost model for XLA.
    flops = 2 * N * HW * (C + 9 * C)                       # shutter + 9-tap conv MACs
    bytes_accessed = 4 * (N * C * HW + C * HW + 9 * HW + N * HW + N * C * HW)
    transcendentals = G * C * HW                           # one sigmoid per grid step

    # Per-step VMEM: double-buffered x/dec/coded tiles + resident mask slabs.
    vmem_needed = 4 * (2 * TB * C * HW                     # x (double-buffered)
                       + 2 * (C * HW + 9 * HW)             # shutter + boundary masks
                       + 2 * TB * C * HW                   # dec output
                       + 2 * TB * HW)                      # coded output
    vmem_limit = int(min(max(4 * vmem_needed, 4 * 1024 * 1024), 64 * 1024 * 1024))

    dec, coded = pl.pallas_call(
        kernel,
        out_shape=(
            jax.ShapeDtypeStruct((N, C * HW), jnp.float32),  # decoder output
            jax.ShapeDtypeStruct((N, HW), jnp.float32),      # coded measurement
        ),
        grid=(G,),
        in_specs=[
            pl.BlockSpec((TB, C, HW), lambda n: (n, 0, 0)),  # x: TB samples / step
            pl.BlockSpec((C, HW), lambda n: (0, 0)),         # shutter mask: resident
            pl.BlockSpec((9, HW), lambda n: (0, 0)),         # boundary masks: resident
            smem,                                            # conv weights (scalars)
            smem,                                            # bias (scalars)
        ],
        out_specs=(
            pl.BlockSpec((TB, C * HW), lambda n: (n, 0)),
            pl.BlockSpec((TB, HW), lambda n: (n, 0)),
        ),
        compiler_params=pltpu.CompilerParams(
            dimension_semantics=("parallel",),               # batch-shardable on v7x
            vmem_limit_bytes=vmem_limit,
        ),
        cost_estimate=pl.CostEstimate(
            flops=flops,
            transcendentals=transcendentals,
            bytes_accessed=bytes_accessed,
        ),
    )(x_f, mask_f, bmask, w_flat, b_f)

    return dec.reshape(N, C, H, W), coded.reshape(N, 1, H, W)


def reference_forward(x, mask, weight, bias):
    m = jax.nn.sigmoid(mask)
    coded = jnp.sum(x * m[None], axis=1, keepdims=True)        # (N,1,H,W)
    dec = lax.conv_general_dilated(
        coded, weight, window_strides=(1, 1), padding=((1, 1), (1, 1)),
        dimension_numbers=("NCHW", "OIHW", "NCHW"))
    dec = dec + bias[None, :, None, None]
    return dec, coded


if __name__ == "__main__":
    N, C, H, W = 2, 4, 16, 16
    key = jax.random.PRNGKey(0)
    k_x, k_m, k_w, k_b = jax.random.split(key, 4)

    x = jax.random.normal(k_x, (N, C, H, W), dtype=jnp.float32)
    mask = jax.random.normal(k_m, (C, H, W), dtype=jnp.float32)
    # Decoder: Conv2d(1, C, kernel_size=3, padding=1)
    weight = jax.random.normal(k_w, (C, 1, 3, 3), dtype=jnp.float32) * 0.1
    bias = jax.random.normal(k_b, (C,), dtype=jnp.float32) * 0.01

    dec, coded = jax.block_until_ready(model_forward(x, mask, weight, bias))
    dec_ref, coded_ref = reference_forward(x, mask, weight, bias)

    assert dec.shape == (N, C, H, W) and coded.shape == (N, 1, H, W)
    assert jnp.allclose(coded, coded_ref, atol=1e-5, rtol=1e-5)
    assert jnp.allclose(dec, dec_ref, atol=1e-5, rtol=1e-5)
    print("KERNEL_OK")
</pallas_src>

<mosaic_0001>
module attributes {stable_mosaic.version = 11 : i64} {
  func.func @_model_kernel(%arg0: i32, %arg1: memref<2x4x256xf32, #tpu.memory_space<vmem>>, %arg2: memref<4x256xf32, #tpu.memory_space<vmem>>, %arg3: memref<9x256xf32, #tpu.memory_space<vmem>>, %arg4: memref<36xf32, #tpu.memory_space<smem>>, %arg5: memref<4xf32, #tpu.memory_space<smem>>, %arg6: memref<2x1024xf32, #tpu.memory_space<vmem>>, %arg7: memref<2x256xf32, #tpu.memory_space<vmem>>) attributes {dimension_semantics = [#tpu.dimension_semantics<parallel>], iteration_bounds = array<i64: 1>, scalar_prefetch = 0 : i64, scratch_operands = 0 : i64, tpu.core_type = #tpu.core_type<tc>, window_params = [{transform_indices = @transform_0, window_bounds = array<i64: 2, 4, 256>}, {pipeline_mode = #tpu.pipeline_mode<synchronous>, transform_indices = @transform_1, window_bounds = array<i64: 4, 256>}, {pipeline_mode = #tpu.pipeline_mode<synchronous>, transform_indices = @transform_2, window_bounds = array<i64: 9, 256>}, {transform_indices = @transform_3, window_bounds = array<i64: 36>}, {transform_indices = @transform_4, window_bounds = array<i64: 4>}, {transform_indices = @transform_5, window_bounds = array<i64: 2, 1024>}, {transform_indices = @transform_6, window_bounds = array<i64: 2, 256>}]} {
    %c0 = arith.constant 0 : index
    %c0_0 = arith.constant 0 : index
    %0 = vector.load %arg2[%c0, %c0_0] : memref<4x256xf32, #tpu.memory_space<vmem>>, vector<4x256xf32>
    %1 = arith.negf %0 : vector<4x256xf32>
    %2 = math.exp %1 : vector<4x256xf32>
    %cst = arith.constant 1.000000e+00 : f32
    %3 = vector.broadcast %cst : f32 to vector<4x256xf32>
    %4 = arith.addf %3, %2 : vector<4x256xf32>
    %5 = arith.divf %3, %4 : vector<4x256xf32>
    %c0_1 = arith.constant 0 : index
    %c0_2 = arith.constant 0 : index
    %c0_3 = arith.constant 0 : index
    %6 = vector.load %arg1[%c0_1, %c0_2, %c0_3] : memref<2x4x256xf32, #tpu.memory_space<vmem>>, vector<2x4x256xf32>
    %7 = vector.shape_cast %5 : vector<4x256xf32> to vector<1x4x256xf32>
    %8 = vector.broadcast %7 : vector<1x4x256xf32> to vector<2x4x256xf32>
    %9 = arith.mulf %6, %8 : vector<2x4x256xf32>
    %cst_4 = arith.constant dense<0.000000e+00> : vector<2x256xf32>
    %10 = vector.multi_reduction <add>, %9, %cst_4 [1] : vector<2x4x256xf32> to vector<2x256xf32>
    %c0_5 = arith.constant 0 : index
    %c0_6 = arith.constant 0 : index
    %11 = vector.load %arg7[%c0_5, %c0_6] : memref<2x256xf32, #tpu.memory_space<vmem>>, vector<2x256xf32>
    tpu.vector_store %arg7[%c0_5, %c0_6], %10 {strides = array<i32>} : memref<2x256xf32, #tpu.memory_space<vmem>>, vector<2x256xf32>,
    %c0_7 = arith.constant 0 : index
    %c0_8 = arith.constant 0 : index
    %12 = vector.load %arg3[%c0_7, %c0_8] : memref<9x256xf32, #tpu.memory_space<vmem>>, vector<9x256xf32>
    %c16 = arith.constant 16 : index
    %13 = memref.load %arg4[%c16] : memref<36xf32, #tpu.memory_space<smem>>
    %14 = vector.broadcast %13 : f32 to vector<2x256xf32>
    %15 = arith.mulf %10, %14 : vector<2x256xf32>
    %c0_9 = arith.constant 0 : index
    %16 = memref.load %arg5[%c0_9] : memref<4xf32, #tpu.memory_space<smem>>
    %17 = vector.broadcast %16 : f32 to vector<2x256xf32>
    %18 = arith.addf %15, %17 : vector<2x256xf32>
    %c17 = arith.constant 17 : index
    %19 = memref.load %arg4[%c17] : memref<36xf32, #tpu.memory_space<smem>>
    %20 = vector.broadcast %19 : f32 to vector<2x256xf32>
    %21 = arith.mulf %10, %20 : vector<2x256xf32>
    %c1 = arith.constant 1 : index
    %22 = memref.load %arg5[%c1] : memref<4xf32, #tpu.memory_space<smem>>
    %23 = vector.broadcast %22 : f32 to vector<2x256xf32>
    %24 = arith.addf %21, %23 : vector<2x256xf32>
    %c18 = arith.constant 18 : index
    %25 = memref.load %arg4[%c18] : memref<36xf32, #tpu.memory_space<smem>>
    %26 = vector.broadcast %25 : f32 to vector<2x256xf32>
    %27 = arith.mulf %10, %26 : vector<2x256xf32>
    %c2 = arith.constant 2 : index
    %28 = memref.load %arg5[%c2] : memref<4xf32, #tpu.memory_space<smem>>
    %29 = vector.broadcast %28 : f32 to vector<2x256xf32>
    %30 = arith.addf %27, %29 : vector<2x256xf32>
    %c19 = arith.constant 19 : index
    %31 = memref.load %arg4[%c19] : memref<36xf32, #tpu.memory_space<smem>>
    %32 = vector.broadcast %31 : f32 to vector<2x256xf32>
    %33 = arith.mulf %10, %32 : vector<2x256xf32>
    %c3 = arith.constant 3 : index
    %34 = memref.load %arg5[%c3] : memref<4xf32, #tpu.memory_space<smem>>
    %35 = vector.broadcast %34 : f32 to vector<2x256xf32>
    %36 = arith.addf %33, %35 : vector<2x256xf32>
    %c17_i32 = arith.constant 17 : i32
    %37 = tpu.dynamic_rotate %10 by %c17_i32 dim 1 : vector<2x256xf32>, i32 -> vector<2x256xf32>
    %38 = vector.extract_strided_slice %12 {offsets = [0, 0], sizes = [1, 256], strides = [1, 1]} : vector<9x256xf32> to vector<1x256xf32>
    %39 = vector.broadcast %38 : vector<1x256xf32> to vector<2x256xf32>
    %40 = arith.mulf %37, %39 : vector<2x256xf32>
    %c0_10 = arith.constant 0 : index
    %41 = memref.load %arg4[%c0_10] : memref<36xf32, #tpu.memory_space<smem>>
    %42 = vector.broadcast %41 : f32 to vector<2x256xf32>
    %43 = arith.mulf %40, %42 : vector<2x256xf32>
    %44 = arith.addf %18, %43 : vector<2x256xf32>
    %c1_11 = arith.constant 1 : index
    %45 = memref.load %arg4[%c1_11] : memref<36xf32, #tpu.memory_space<smem>>
    %46 = vector.broadcast %45 : f32 to vector<2x256xf32>
    %47 = arith.mulf %40, %46 : vector<2x256xf32>
    %48 = arith.addf %24, %47 : vector<2x256xf32>
    %c2_12 = arith.constant 2 : index
    %49 = memref.load %arg4[%c2_12] : memref<36xf32, #tpu.memory_space<smem>>
    %50 = vector.broadcast %49 : f32 to vector<2x256xf32>
    %51 = arith.mulf %40, %50 : vector<2x256xf32>
    %52 = arith.addf %30, %51 : vector<2x256xf32>
    %c3_13 = arith.constant 3 : index
    %53 = memref.load %arg4[%c3_13] : memref<36xf32, #tpu.memory_space<smem>>
    %54 = vector.broadcast %53 : f32 to vector<2x256xf32>
    %55 = arith.mulf %40, %54 : vector<2x256xf32>
    %56 = arith.addf %36, %55 : vector<2x256xf32>
    %c16_i32 = arith.constant 16 : i32
    %57 = tpu.dynamic_rotate %10 by %c16_i32 dim 1 : vector<2x256xf32>, i32 -> vector<2x256xf32>
    %58 = vector.extract_strided_slice %12 {offsets = [1, 0], sizes = [1, 256], strides = [1, 1]} : vector<9x256xf32> to vector<1x256xf32>
    %59 = vector.broadcast %58 : vector<1x256xf32> to vector<2x256xf32>
    %60 = arith.mulf %57, %59 : vector<2x256xf32>
    %c4 = arith.constant 4 : index
    %61 = memref.load %arg4[%c4] : memref<36xf32, #tpu.memory_space<smem>>
    %62 = vector.broadcast %61 : f32 to vector<2x256xf32>
    %63 = arith.mulf %60, %62 : vector<2x256xf32>
    %64 = arith.addf %44, %63 : vector<2x256xf32>
    %c5 = arith.constant 5 : index
    %65 = memref.load %arg4[%c5] : memref<36xf32, #tpu.memory_space<smem>>
    %66 = vector.broadcast %65 : f32 to vector<2x256xf32>
    %67 = arith.mulf %60, %66 : vector<2x256xf32>
    %68 = arith.addf %48, %67 : vector<2x256xf32>
    %c6 = arith.constant 6 : index
    %69 = memref.load %arg4[%c6] : memref<36xf32, #tpu.memory_space<smem>>
    %70 = vector.broadcast %69 : f32 to vector<2x256xf32>
    %71 = arith.mulf %60, %70 : vector<2x256xf32>
    %72 = arith.addf %52, %71 : vector<2x256xf32>
    %c7 = arith.constant 7 : index
    %73 = memref.load %arg4[%c7] : memref<36xf32, #tpu.memory_space<smem>>
    %74 = vector.broadcast %73 : f32 to vector<2x256xf32>
    %75 = arith.mulf %60, %74 : vector<2x256xf32>
    %76 = arith.addf %56, %75 : vector<2x256xf32>
    %c15_i32 = arith.constant 15 : i32
    %77 = tpu.dynamic_rotate %10 by %c15_i32 dim 1 : vector<2x256xf32>, i32 -> vector<2x256xf32>
    %78 = vector.extract_strided_slice %12 {offsets = [2, 0], sizes = [1, 256], strides = [1, 1]} : vector<9x256xf32> to vector<1x256xf32>
    %79 = vector.broadcast %78 : vector<1x256xf32> to vector<2x256xf32>
    %80 = arith.mulf %77, %79 : vector<2x256xf32>
    %c8 = arith.constant 8 : index
    %81 = memref.load %arg4[%c8] : memref<36xf32, #tpu.memory_space<smem>>
    %82 = vector.broadcast %81 : f32 to vector<2x256xf32>
    %83 = arith.mulf %80, %82 : vector<2x256xf32>
    %84 = arith.addf %64, %83 : vector<2x256xf32>
    %c9 = arith.constant 9 : index
    %85 = memref.load %arg4[%c9] : memref<36xf32, #tpu.memory_space<smem>>
    %86 = vector.broadcast %85 : f32 to vector<2x256xf32>
    %87 = arith.mulf %80, %86 : vector<2x256xf32>
    %88 = arith.addf %68, %87 : vector<2x256xf32>
    %c10 = arith.constant 10 : index
    %89 = memref.load %arg4[%c10] : memref<36xf32, #tpu.memory_space<smem>>
    %90 = vector.broadcast %89 : f32 to vector<2x256xf32>
    %91 = arith.mulf %80, %90 : vector<2x256xf32>
    %92 = arith.addf %72, %91 : vector<2x256xf32>
    %c11 = arith.constant 11 : index
    %93 = memref.load %arg4[%c11] : memref<36xf32, #tpu.memory_space<smem>>
    %94 = vector.broadcast %93 : f32 to vector<2x256xf32>
    %95 = arith.mulf %80, %94 : vector<2x256xf32>
    %96 = arith.addf %76, %95 : vector<2x256xf32>
    %c1_i32 = arith.constant 1 : i32
    %97 = tpu.dynamic_rotate %10 by %c1_i32 dim 1 : vector<2x256xf32>, i32 -> vector<2x256xf32>
    %98 = vector.extract_strided_slice %12 {offsets = [3, 0], sizes = [1, 256], strides = [1, 1]} : vector<9x256xf32> to vector<1x256xf32>
    %99 = vector.broadcast %98 : vector<1x256xf32> to vector<2x256xf32>
    %100 = arith.mulf %97, %99 : vector<2x256xf32>
    %c12 = arith.constant 12 : index
    %101 = memref.load %arg4[%c12] : memref<36xf32, #tpu.memory_space<smem>>
    %102 = vector.broadcast %101 : f32 to vector<2x256xf32>
    %103 = arith.mulf %100, %102 : vector<2x256xf32>
    %104 = arith.addf %84, %103 : vector<2x256xf32>
    %c13 = arith.constant 13 : index
    %105 = memref.load %arg4[%c13] : memref<36xf32, #tpu.memory_space<smem>>
    %106 = vector.broadcast %105 : f32 to vector<2x256xf32>
    %107 = arith.mulf %100, %106 : vector<2x256xf32>
    %108 = arith.addf %88, %107 : vector<2x256xf32>
    %c14 = arith.constant 14 : index
    %109 = memref.load %arg4[%c14] : memref<36xf32, #tpu.memory_space<smem>>
    %110 = vector.broadcast %109 : f32 to vector<2x256xf32>
    %111 = arith.mulf %100, %110 : vector<2x256xf32>
    %112 = arith.addf %92, %111 : vector<2x256xf32>
    %c15 = arith.constant 15 : index
    %113 = memref.load %arg4[%c15] : memref<36xf32, #tpu.memory_space<smem>>
    %114 = vector.broadcast %113 : f32 to vector<2x256xf32>
    %115 = arith.mulf %100, %114 : vector<2x256xf32>
    %116 = arith.addf %96, %115 : vector<2x256xf32>
    %c255_i32 = arith.constant 255 : i32
    %117 = tpu.dynamic_rotate %10 by %c255_i32 dim 1 : vector<2x256xf32>, i32 -> vector<2x256xf32>
    %118 = vector.extract_strided_slice %12 {offsets = [5, 0], sizes = [1, 256], strides = [1, 1]} : vector<9x256xf32> to vector<1x256xf32>
    %119 = vector.broadcast %118 : vector<1x256xf32> to vector<2x256xf32>
    %120 = arith.mulf %117, %119 : vector<2x256xf32>
    %c20 = arith.constant 20 : index
    %121 = memref.load %arg4[%c20] : memref<36xf32, #tpu.memory_space<smem>>
    %122 = vector.broadcast %121 : f32 to vector<2x256xf32>
    %123 = arith.mulf %120, %122 : vector<2x256xf32>
    %124 = arith.addf %104, %123 : vector<2x256xf32>
    %c21 = arith.constant 21 : index
    %125 = memref.load %arg4[%c21] : memref<36xf32, #tpu.memory_space<smem>>
    %126 = vector.broadcast %125 : f32 to vector<2x256xf32>
    %127 = arith.mulf %120, %126 : vector<2x256xf32>
    %128 = arith.addf %108, %127 : vector<2x256xf32>
    %c22 = arith.constant 22 : index
    %129 = memref.load %arg4[%c22] : memref<36xf32, #tpu.memory_space<smem>>
    %130 = vector.broadcast %129 : f32 to vector<2x256xf32>
    %131 = arith.mulf %120, %130 : vector<2x256xf32>
    %132 = arith.addf %112, %131 : vector<2x256xf32>
    %c23 = arith.constant 23 : index
    %133 = memref.load %arg4[%c23] : memref<36xf32, #tpu.memory_space<smem>>
    %134 = vector.broadcast %133 : f32 to vector<2x256xf32>
    %135 = arith.mulf %120, %134 : vector<2x256xf32>
    %136 = arith.addf %116, %135 : vector<2x256xf32>
    %c241_i32 = arith.constant 241 : i32
    %137 = tpu.dynamic_rotate %10 by %c241_i32 dim 1 : vector<2x256xf32>, i32 -> vector<2x256xf32>
    %138 = vector.extract_strided_slice %12 {offsets = [6, 0], sizes = [1, 256], strides = [1, 1]} : vector<9x256xf32> to vector<1x256xf32>
    %139 = vector.broadcast %138 : vector<1x256xf32> to vector<2x256xf32>
    %140 = arith.mulf %137, %139 : vector<2x256xf32>
    %c24 = arith.constant 24 : index
    %141 = memref.load %arg4[%c24] : memref<36xf32, #tpu.memory_space<smem>>
    %142 = vector.broadcast %141 : f32 to vector<2x256xf32>
    %143 = arith.mulf %140, %142 : vector<2x256xf32>
    %144 = arith.addf %124, %143 : vector<2x256xf32>
    %c25 = arith.constant 25 : index
    %145 = memref.load %arg4[%c25] : memref<36xf32, #tpu.memory_space<smem>>
    %146 = vector.broadcast %145 : f32 to vector<2x256xf32>
    %147 = arith.mulf %140, %146 : vector<2x256xf32>
    %148 = arith.addf %128, %147 : vector<2x256xf32>
    %c26 = arith.constant 26 : index
    %149 = memref.load %arg4[%c26] : memref<36xf32, #tpu.memory_space<smem>>
    %150 = vector.broadcast %149 : f32 to vector<2x256xf32>
    %151 = arith.mulf %140, %150 : vector<2x256xf32>
    %152 = arith.addf %132, %151 : vector<2x256xf32>
    %c27 = arith.constant 27 : index
    %153 = memref.load %arg4[%c27] : memref<36xf32, #tpu.memory_space<smem>>
    %154 = vector.broadcast %153 : f32 to vector<2x256xf32>
    %155 = arith.mulf %140, %154 : vector<2x256xf32>
    %156 = arith.addf %136, %155 : vector<2x256xf32>
    %c240_i32 = arith.constant 240 : i32
    %157 = tpu.dynamic_rotate %10 by %c240_i32 dim 1 : vector<2x256xf32>, i32 -> vector<2x256xf32>
    %158 = vector.extract_strided_slice %12 {offsets = [7, 0], sizes = [1, 256], strides = [1, 1]} : vector<9x256xf32> to vector<1x256xf32>
    %159 = vector.broadcast %158 : vector<1x256xf32> to vector<2x256xf32>
    %160 = arith.mulf %157, %159 : vector<2x256xf32>
    %c28 = arith.constant 28 : index
    %161 = memref.load %arg4[%c28] : memref<36xf32, #tpu.memory_space<smem>>
    %162 = vector.broadcast %161 : f32 to vector<2x256xf32>
    %163 = arith.mulf %160, %162 : vector<2x256xf32>
    %164 = arith.addf %144, %163 : vector<2x256xf32>
    %c29 = arith.constant 29 : index
    %165 = memref.load %arg4[%c29] : memref<36xf32, #tpu.memory_space<smem>>
    %166 = vector.broadcast %165 : f32 to vector<2x256xf32>
    %167 = arith.mulf %160, %166 : vector<2x256xf32>
    %168 = arith.addf %148, %167 : vector<2x256xf32>
    %c30 = arith.constant 30 : index
    %169 = memref.load %arg4[%c30] : memref<36xf32, #tpu.memory_space<smem>>
    %170 = vector.broadcast %169 : f32 to vector<2x256xf32>
    %171 = arith.mulf %160, %170 : vector<2x256xf32>
    %172 = arith.addf %152, %171 : vector<2x256xf32>
    %c31 = arith.constant 31 : index
    %173 = memref.load %arg4[%c31] : memref<36xf32, #tpu.memory_space<smem>>
    %174 = vector.broadcast %173 : f32 to vector<2x256xf32>
    %175 = arith.mulf %160, %174 : vector<2x256xf32>
    %176 = arith.addf %156, %175 : vector<2x256xf32>
    %c239_i32 = arith.constant 239 : i32
    %177 = tpu.dynamic_rotate %10 by %c239_i32 dim 1 : vector<2x256xf32>, i32 -> vector<2x256xf32>
    %178 = vector.extract_strided_slice %12 {offsets = [8, 0], sizes = [1, 256], strides = [1, 1]} : vector<9x256xf32> to vector<1x256xf32>
    %179 = vector.broadcast %178 : vector<1x256xf32> to vector<2x256xf32>
    %180 = arith.mulf %177, %179 : vector<2x256xf32>
    %c32 = arith.constant 32 : index
    %181 = memref.load %arg4[%c32] : memref<36xf32, #tpu.memory_space<smem>>
    %182 = vector.broadcast %181 : f32 to vector<2x256xf32>
    %183 = arith.mulf %180, %182 : vector<2x256xf32>
    %184 = arith.addf %164, %183 : vector<2x256xf32>
    %c33 = arith.constant 33 : index
    %185 = memref.load %arg4[%c33] : memref<36xf32, #tpu.memory_space<smem>>
    %186 = vector.broadcast %185 : f32 to vector<2x256xf32>
    %187 = arith.mulf %180, %186 : vector<2x256xf32>
    %188 = arith.addf %168, %187 : vector<2x256xf32>
    %c34 = arith.constant 34 : index
    %189 = memref.load %arg4[%c34] : memref<36xf32, #tpu.memory_space<smem>>
    %190 = vector.broadcast %189 : f32 to vector<2x256xf32>
    %191 = arith.mulf %180, %190 : vector<2x256xf32>
    %192 = arith.addf %172, %191 : vector<2x256xf32>
    %c35 = arith.constant 35 : index
    %193 = memref.load %arg4[%c35] : memref<36xf32, #tpu.memory_space<smem>>
    %194 = vector.broadcast %193 : f32 to vector<2x256xf32>
    %195 = arith.mulf %180, %194 : vector<2x256xf32>
    %196 = arith.addf %176, %195 : vector<2x256xf32>
    %c0_14 = arith.constant 0 : index
    %c0_15 = arith.constant 0 : index
    %197 = vector.load %arg6[%c0_14, %c0_15] : memref<2x1024xf32, #tpu.memory_space<vmem>>, vector<2x256xf32>
    tpu.vector_store %arg6[%c0_14, %c0_15], %184 {strides = array<i32>} : memref<2x1024xf32, #tpu.memory_space<vmem>>, vector<2x256xf32>,
    %c0_16 = arith.constant 0 : index
    %c256 = arith.constant 256 : index
    %198 = vector.load %arg6[%c0_16, %c256] : memref<2x1024xf32, #tpu.memory_space<vmem>>, vector<2x256xf32>
    tpu.vector_store %arg6[%c0_16, %c256], %188 {strides = array<i32>} : memref<2x1024xf32, #tpu.memory_space<vmem>>, vector<2x256xf32>,
    %c0_17 = arith.constant 0 : index
    %c512 = arith.constant 512 : index
    %199 = vector.load %arg6[%c0_17, %c512] : memref<2x1024xf32, #tpu.memory_space<vmem>>, vector<2x256xf32>
    tpu.vector_store %arg6[%c0_17, %c512], %192 {strides = array<i32>} : memref<2x1024xf32, #tpu.memory_space<vmem>>, vector<2x256xf32>,
    %c0_18 = arith.constant 0 : index
    %c768 = arith.constant 768 : index
    %200 = vector.load %arg6[%c0_18, %c768] : memref<2x1024xf32, #tpu.memory_space<vmem>>, vector<2x256xf32>
    tpu.vector_store %arg6[%c0_18, %c768], %196 {strides = array<i32>} : memref<2x1024xf32, #tpu.memory_space<vmem>>, vector<2x256xf32>,
    return
  }
  func.func @transform_0(%arg0: i32) -> (i32, i32, i32) {
    %c0_i32 = arith.constant 0 : i32
    %c0_i32_0 = arith.constant 0 : i32
    %c0_i32_1 = arith.constant 0 : i32
    return %arg0, %c0_i32, %c0_i32_0 : i32, i32, i32
  }
  func.func @transform_1(%arg0: i32) -> (i32, i32) {
    %c0_i32 = arith.constant 0 : i32
    %c0_i32_0 = arith.constant 0 : i32
    %c0_i32_1 = arith.constant 0 : i32
    return %c0_i32, %c0_i32_0 : i32, i32
  }
  func.func @transform_2(%arg0: i32) -> (i32, i32) {
    %c0_i32 = arith.constant 0 : i32
    %c0_i32_0 = arith.constant 0 : i32
    %c0_i32_1 = arith.constant 0 : i32
    return %c0_i32, %c0_i32_0 : i32, i32
  }
  func.func @transform_3(%arg0: i32) -> i32 {
    %c0_i32 = arith.constant 0 : i32
    %c0_i32_0 = arith.constant 0 : i32
    return %c0_i32 : i32
  }
  func.func @transform_4(%arg0: i32) -> i32 {
    %c0_i32 = arith.constant 0 : i32
    %c0_i32_0 = arith.constant 0 : i32
    return %c0_i32 : i32
  }
  func.func @transform_5(%arg0: i32) -> (i32, i32) {
    %c0_i32 = arith.constant 0 : i32
    %c0_i32_0 = arith.constant 0 : i32
    return %arg0, %c0_i32 : i32, i32
  }
  func.func @transform_6(%arg0: i32) -> (i32, i32) {
    %c0_i32 = arith.constant 0 : i32
    %c0_i32_0 = arith.constant 0 : i32
    return %arg0, %c0_i32 : i32, i32
  }
}

</mosaic_0001>

<llo_original>
// kernel: tpu_custom_call.1
$region0: #{tpu_custom_call.1}
  #allocation0 [shape = 'u32[]', space=smem, size = 0x4, offset = 0x4, fixed_abs, tag = 'smem constant byte address 0x4 - core index']
  #allocation1 [shape = 'u32[72,128]{1,0:T(1,128)}', space=vmem, size = 0x9000, scoped, tag = 'internal scratch']
  %s0 = inlined_call_operand.hbm [shape: f32[2,4,256], index: 0, kind: input, shape index: {}]
  %s1 = inlined_call_operand.hbm [shape: f32[4,256], index: 1, kind: input, shape index: {}]
  %s2 = inlined_call_operand.hbm [shape: f32[9,256], index: 2, kind: input, shape index: {}]
  %s3 = inlined_call_operand.vmem [shape: f32[36], index: 3, kind: input, shape index: {}]
  %s4 = inlined_call_operand.vmem [shape: f32[4], index: 4, kind: input, shape index: {}]
  %s5 = inlined_call_operand.hbm [shape: f32[2,1024], index: 5, kind: output, shape index: {0}]
  %s6 = inlined_call_operand.hbm [shape: f32[2,256], index: 6, kind: output, shape index: {1}]
  %7 = xla_tuple %s5, %s6
  %s8 = sld [smem:[#allocation0]]
  $region58: #{tpu_custom_call.1} parent=0
    _
  %s10 = ssub.s32 1, %s8
  %s11 = scalar_select 0, %s10, %s8
  $region1: #{tpu_custom_call.1} parent=0
    #allocation2 [shape = 'u8[8192]{0}', space=vmem, size = 0x2000, scoped, tag = 'input window, operand 0, single buffered']
    #allocation3 [shape = 's32[1]{0}', space=sflag, size = 0x4, scoped, tag = 'scoped memory for tpu_custom_call.1']
    #allocation4 [shape = 's32[1]{0}', space=sflag, size = 0x4, scoped, tag = 'scoped memory for tpu_custom_call.1']
    #allocation5 [shape = 's32[1]{0}', space=sflag, size = 0x4, scoped, tag = 'scoped memory for tpu_custom_call.1']
    #allocation6 [shape = 'u8[4096]{0}', space=vmem, size = 0x1000, scoped, tag = 'input window, operand 1, single buffered']
    #allocation7 [shape = 's32[1]{0}', space=sflag, size = 0x4, scoped, tag = 'scoped memory for tpu_custom_call.1']
    #allocation8 [shape = 'u8[16384]{0}', space=vmem, size = 0x4000, scoped, tag = 'input window, operand 2, single buffered']
    #allocation9 [shape = 'u8[512]{0}', space=smem, size = 0x200, scoped, tag = 'input window, operand 3, single buffered']
    #allocation10 [shape = 'u8[512]{0}', space=smem, size = 0x200, scoped, tag = 'input window, operand 4, single buffered']
    #allocation11 [shape = 's32[1]{0}', space=sflag, size = 0x4, scoped, tag = 'scoped memory for tpu_custom_call.1']
    #allocation12 [shape = 'u8[8192]{0}', space=vmem, size = 0x2000, scoped, tag = 'output window, operand 0, single buffered']
    #allocation13 [shape = 'u8[2048]{0}', space=vmem, size = 0x800, scoped, tag = 'output window, operand 1, single buffered']
    #allocation14 [shape = 's32[1]{0}', space=sflag, size = 0x4, scoped, tag = 'scoped memory for tpu_custom_call.1']
    %12 = vsyncpa [#allocation3], 0
    %13 = vsyncpa [#allocation7], 0
    %14 = vsyncpa [#allocation5], 0
    %15 = vsyncpa [#allocation11], 0
    %16 = vsyncpa [#allocation4], 0
    %17 = vsyncpa [#allocation14], 0
    // Predicated region
    $region2: #{tpu_custom_call.1} parent=1 // pred_check
      _
    $region3: #{tpu_custom_call.1} parent=1 // pred_check_branch
      %19 = sbr.rel (0) target = $region5
    $region4: #{tpu_custom_call.1} parent=1 // pred_region
      %21 = vsyncadd [#allocation3], 0
      %s22 = sshll.u32 %s0, 4
      %s23 = int_to_ptr.hbm [resolvable:$true] %s22
      %s24 = sshll.u32 [#allocation2], 4
      %s25 = int_to_ptr.vmem [resolvable:$true] %s24
      %30 = dma.hbm_to_vmem [thread:$0]  %s23, 256, %s25, [#allocation3], 128, 128, 8
    $region5: #{tpu_custom_call.1} parent=1 // pred_fallthru
      _
    // Predicated region
    $region6: #{tpu_custom_call.1} parent=1 // pred_check
      _
    $region7: #{tpu_custom_call.1} parent=1 // pred_check_branch
      %32 = sbr.rel (0) target = $region9
    $region8: #{tpu_custom_call.1} parent=1 // pred_region
      %34 = vsyncadd [#allocation7], 0
      %s36 = sshll.u32 %s1, 4
      %s37 = int_to_ptr.hbm [resolvable:$true] %s36
      %s38 = sshll.u32 [#allocation6], 4
      %s39 = int_to_ptr.vmem [resolvable:$true] %s38
      %41 = dma.hbm_to_vmem [thread:$0]  %s37, 128, %s39, [#allocation7]
    $region9: #{tpu_custom_call.1} parent=1 // pred_fallthru
      _
    // Predicated region
    $region10: #{tpu_custom_call.1} parent=1 // pred_check
      _
    $region11: #{tpu_custom_call.1} parent=1 // pred_check_branch
      %43 = sbr.rel (0) target = $region13
    $region12: #{tpu_custom_call.1} parent=1 // pred_region
      %45 = vsyncadd [#allocation7], 0
      %s46 = sshll.u32 %s2, 4
      %s47 = int_to_ptr.hbm [resolvable:$true] %s46
      %s48 = sshll.u32 [#allocation8], 4
      %s49 = int_to_ptr.vmem [resolvable:$true] %s48
      %54 = dma.hbm_to_vmem [thread:$0]  %s47, 512, %s49, [#allocation7], 256, 256, 16
    $region13: #{tpu_custom_call.1} parent=1 // pred_fallthru
      _
    // Predicated region
    $region14: #{tpu_custom_call.1} parent=1 // pred_check
      _
    $region15: #{tpu_custom_call.1} parent=1 // pred_check_branch
      %56 = sbr.rel (0) target = $region17
    $region16: #{tpu_custom_call.1} parent=1 // pred_region
      %58 = vsyncadd [#allocation5], 0
      %s60 = sshll.u32 %s3, 4
      %s61 = int_to_ptr.vmem [resolvable:$true] %s60
      %63 = dma.vmem_to_smem %s61, 16, [#allocation9], [#allocation5]
    $region17: #{tpu_custom_call.1} parent=1 // pred_fallthru
      _
    // Predicated region
    $region18: #{tpu_custom_call.1} parent=1 // pred_check
      _
    $region19: #{tpu_custom_call.1} parent=1 // pred_check_branch
      %65 = sbr.rel (0) target = $region21
    $region20: #{tpu_custom_call.1} parent=1 // pred_region
      %67 = vsyncadd [#allocation11], 0
      %s69 = sshll.u32 %s4, 4
      %s70 = int_to_ptr.vmem [resolvable:$true] %s69
      %72 = dma.vmem_to_smem %s70, 16, [#allocation10], [#allocation11]
    $region21: #{tpu_custom_call.1} parent=1 // pred_fallthru
      _
    // Predicated region
    $region22: #{tpu_custom_call.1} parent=1 // pred_check
      _
    $region23: #{tpu_custom_call.1} parent=1 // pred_check_branch
      %74 = sbr.rel (0) target = $region25
    $region24: #{tpu_custom_call.1} parent=1 // pred_region
      %76 = dma.done [#allocation3], 256
    $region25: #{tpu_custom_call.1} parent=1 // pred_fallthru
      _
    // Predicated region
    $region26: #{tpu_custom_call.1} parent=1 // pred_check
      _
    $region27: #{tpu_custom_call.1} parent=1 // pred_check_branch
      %78 = sbr.rel (0) target = $region29
    $region28: #{tpu_custom_call.1} parent=1 // pred_region
      %80 = dma.done [#allocation7], 128
    $region29: #{tpu_custom_call.1} parent=1 // pred_fallthru
      _
    // Predicated region
    $region30: #{tpu_custom_call.1} parent=1 // pred_check
      _
    $region31: #{tpu_custom_call.1} parent=1 // pred_check_branch
      %82 = sbr.rel (0) target = $region33
    $region32: #{tpu_custom_call.1} parent=1 // pred_region
      %84 = dma.done [#allocation7], 512
    $region33: #{tpu_custom_call.1} parent=1 // pred_fallthru
      _
    // Predicated region
    $region34: #{tpu_custom_call.1} parent=1 // pred_check
      _
    $region35: #{tpu_custom_call.1} parent=1 // pred_check_branch
      %86 = sbr.rel (0) target = $region37
    $region36: #{tpu_custom_call.1} parent=1 // pred_region
      %88 = dma.done [#allocation5], 16
    $region37: #{tpu_custom_call.1} parent=1 // pred_fallthru
      _
    // Predicated region
    $region38: #{tpu_custom_call.1} parent=1 // pred_check
      _
    $region39: #{tpu_custom_call.1} parent=1 // pred_check_branch
      %90 = sbr.rel (0) target = $region41
    $region40: #{tpu_custom_call.1} parent=1 // pred_region
      %92 = dma.done [#allocation11], 16
    $region41: #{tpu_custom_call.1} parent=1 // pred_fallthru
      _
    %93 = sfence
    %v94 = vld [vmem:[#allocation6] sm:$0xff]
    %v95 = vxor.u32 %v94, 2147483648
    %v96 = vmul.f32 %v95, 1.442695
    %v97 = vpow.pop %v96
    %v98 = vadd.f32 %v97, 1.0
    %v99 = vrcp.pop %v98
    %v100 = vmul.f32 %v98, %v99
    %v101 = vsub.f32 1.0, %v100
    %v102 = vmul.f32 %v99, %v101
    %v103 = vadd.f32 %v99, %v102
    %vm104 = vweird.f32 %v98
    %vm105 = vweird.f32 %v99
    %vm106 = vmor %vm104, %vm105
    %v107 = vsel %vm106, %v99, %v103
    %v108 = vand.u32 2147483647, %v98
    %vm109 = vcmp.eq.f32.partialorder %v108, 8.507059e+37
    %v110 = vand.u32 %v98, 2147483648
    %v111 = vor.u32 1.1754944e-38, %v110
    %v112 = vsel %vm109, %v111, %v107
    %v113 = vmul.f32 1.0, %v112
    %v114 = vld [vmem:[#allocation2] sm:$0xff]
    %v115 = vld [vmem:[#allocation2 + $0x8] sm:$0xff]
    %v116 = vmul.f32 %v114, %v113
    %v117 = vmul.f32 %v115, %v113
    %120 = vst [vmem:[#allocation1] ss:$2 sm:$0xff] %v116
    %v121 = vld.sshfl [vmem:[#allocation1] sm:$0xff pattern:$0x75316420]
    %v122 = vld.sshfl [vmem:[#allocation1 + $0x8] sm:$0xff pattern:$0x75316420]
    %s123 = scalar_lea.vmem [#allocation1], 16
    %124 = vst [vmem:[%s123] ss:$2 sm:$0xff] %v117
    %v125 = vld.sshfl [vmem:[#allocation1 + $0x10] sm:$0xff pattern:$0x75316420]
    %v126 = vld.sshfl [vmem:[#allocation1 + $0x18] sm:$0xff pattern:$0x75316420]
    %vm131 = vcmask 1043456
    %v132 = vsel %vm131, %v121, 0.0
    %v133 = vrot.slane %v132, 4
    %v134 = vadd.f32 %v132, %v133
    %v135 = vrot.slane %v134, 2
    %v136 = vadd.f32 %v134, %v135
    %v137 = vrot.slane %v136, 1
    %v138 = vadd.f32 %v136, %v137
    %v139 = vsel %vm131, %v122, 0.0
    %v140 = vrot.slane %v139, 4
    %v141 = vadd.f32 %v139, %v140
    %v142 = vrot.slane %v141, 2
    %v143 = vadd.f32 %v141, %v142
    %v144 = vrot.slane %v143, 1
    %v145 = vadd.f32 %v143, %v144
    %v146 = vsel %vm131, %v125, 0.0
    %v147 = vrot.slane %v146, 4
    %v148 = vadd.f32 %v146, %v147
    %v149 = vrot.slane %v148, 2
    %v150 = vadd.f32 %v148, %v149
    %v151 = vrot.slane %v150, 1
    %v152 = vadd.f32 %v150, %v151
    %v153 = vsel %vm131, %v126, 0.0
    %v154 = vrot.slane %v153, 4
    %v155 = vadd.f32 %v153, %v154
    %v156 = vrot.slane %v155, 2
    %v157 = vadd.f32 %v155, %v156
    %v158 = vrot.slane %v157, 1
    %v159 = vadd.f32 %v157, %v158
    %v164 = vrot.slane %v145, 6
    %v165 = vrot.slane %v159, 6
    %vm166 = vcmask 1041408
    %v167 = vsel %vm166, %v138, %v164
    %v168 = vsel %vm166, %v152, %v165
    %vm169 = vcmask 1044484
    %v170 = vsel %vm169, %v167, %v167
    %vm171 = vcmask 1046534
    %v172 = vsel %vm171, %v167, %v170
    %v173 = vrot.slane %v168, 7
    %vm174 = vcmask 1041409
    %v175 = vsel %vm174, %v173, %v172
    %vm176 = vcmask 1043459
    %v177 = vsel %vm176, %v173, %v175
    %vm178 = vcmask 1045509
    %v179 = vsel %vm178, %v173, %v177
    %vm180 = vcmask 1047559
    %v181 = vsel %vm180, %v173, %v179
    %183 = vst [vmem:[#allocation13] sm:$0xf] %v181
    %v184 = vld [vmem:[#allocation8] sm:$0xff]
    %v185 = vld [vmem:[#allocation8 + $0x8] sm:$0xff]
    %v186 = vld [vmem:[#allocation8 + $0x10] sm:$0x1]
    %v187 = vld [vmem:[#allocation8 + $0x18] sm:$0x1]
    %s188 = sld [smem:[#allocation9 + $0x10]]
    %v189 = vstv %s188
    %v190 = vmul.f32 %v138, %v189
    %v191 = vmul.f32 %v145, %v189
    %v192 = vmul.f32 %v152, %v189
    %v193 = vmul.f32 %v159, %v189
    %s194 = sld [smem:[#allocation10]]
    %v195 = vstv %s194
    %v196 = vadd.f32 %v190, %v195
    %v197 = vadd.f32 %v191, %v195
    %v198 = vadd.f32 %v192, %v195
    %v199 = vadd.f32 %v193, %v195
    %s200 = sld [smem:[#allocation9 + $0x11]]
    %v201 = vstv %s200
    %v202 = vmul.f32 %v138, %v201
    %v203 = vmul.f32 %v145, %v201
    %v204 = vmul.f32 %v152, %v201
    %v205 = vmul.f32 %v159, %v201
    %s206 = sld [smem:[#allocation10 + $0x1]]
    %v207 = vstv %s206
    %v208 = vadd.f32 %v202, %v207
    %v209 = vadd.f32 %v203, %v207
    %v210 = vadd.f32 %v204, %v207
    %v211 = vadd.f32 %v205, %v207
    %s212 = sld [smem:[#allocation9 + $0x12]]
    %v213 = vstv %s212
    %v214 = vmul.f32 %v138, %v213
    %v215 = vmul.f32 %v145, %v213
    %v216 = vmul.f32 %v152, %v213
    %v217 = vmul.f32 %v159, %v213
    %s218 = sld [smem:[#allocation10 + $0x2]]
    %v219 = vstv %s218
    %v220 = vadd.f32 %v214, %v219
    %v221 = vadd.f32 %v215, %v219
    %v222 = vadd.f32 %v216, %v219
    %v223 = vadd.f32 %v217, %v219
    %s224 = sld [smem:[#allocation9 + $0x13]]
    %v225 = vstv %s224
    %v226 = vmul.f32 %v138, %v225
    %v227 = vmul.f32 %v145, %v225
    %v228 = vmul.f32 %v152, %v225
    %v229 = vmul.f32 %v159, %v225
    %s230 = sld [smem:[#allocation10 + $0x3]]
    %v231 = vstv %s230
    %v232 = vadd.f32 %v226, %v231
    %v233 = vadd.f32 %v227, %v231
    %v234 = vadd.f32 %v228, %v231
    %v235 = vadd.f32 %v229, %v231
    %v236 = vsel %vm174, %v152, %v138
    %v237 = vsel %vm174, %v159, %v145
    %240 = vrot.lane.b32.xlu0 %v236, 17
    %v241 = vpop.permute.xlu0 %240
    %242 = vrot.lane.b32.xlu0 %v237, 17
    %v243 = vpop.permute.xlu0 %242
    %v244 = vlaneseq
    %v245 = vand.u32 %v244, 127
    %vm246 = vcmp.lt.s32.totalorder %v245, 17
    %v247 = vsel %vm246, %v241, %v243
    %v248 = vsel %vm246, %v243, %v241
    %v249 = vperm.slane %v184, 0
    %v250 = vperm.slane %v185, 0
    %v251 = vmul.f32 %v248, %v249
    %v252 = vmul.f32 %v247, %v250
    %s253 = sld [smem:[#allocation9]]
    %v254 = vstv %s253
    %v255 = vmul.f32 %v251, %v254
    %v256 = vmul.f32 %v252, %v254
    %v259 = vrot.slane %v255, 1
    %v260 = vrot.slane %v256, 1
    %v265 = vadd.f32 %v196, %v255
    %v266 = vadd.f32 %v197, %v256
    %v267 = vadd.f32 %v198, %v259
    %v268 = vadd.f32 %v199, %v260
    %s269 = sld [smem:[#allocation9 + $0x1]]
    %v270 = vstv %s269
    %v271 = vmul.f32 %v251, %v270
    %v272 = vmul.f32 %v252, %v270
    %v275 = vrot.slane %v271, 1
    %v276 = vrot.slane %v272, 1
    %v281 = vadd.f32 %v208, %v271
    %v282 = vadd.f32 %v209, %v272
    %v283 = vadd.f32 %v210, %v275
    %v284 = vadd.f32 %v211, %v276
    %s285 = sld [smem:[#allocation9 + $0x2]]
    %v286 = vstv %s285
    %v287 = vmul.f32 %v251, %v286
    %v288 = vmul.f32 %v252, %v286
    %v291 = vrot.slane %v287, 1
    %v292 = vrot.slane %v288, 1
    %v297 = vadd.f32 %v220, %v287
    %v298 = vadd.f32 %v221, %v288
    %v299 = vadd.f32 %v222, %v291
    %v300 = vadd.f32 %v223, %v292
    %s301 = sld [smem:[#allocation9 + $0x3]]
    %v302 = vstv %s301
    %v303 = vmul.f32 %v251, %v302
    %v304 = vmul.f32 %v252, %v302
    %v307 = vrot.slane %v303, 1
    %v308 = vrot.slane %v304, 1
    %v313 = vadd.f32 %v232, %v303
    %v314 = vadd.f32 %v233, %v304
    %v315 = vadd.f32 %v234, %v307
    %v316 = vadd.f32 %v235, %v308
    %317 = vrot.lane.b32.xlu0 %v236, 16
    %v318 = vpop.permute.xlu0 %317
    %319 = vrot.lane.b32.xlu0 %v237, 16
    %v320 = vpop.permute.xlu0 %319
    %vm321 = vcmp.lt.s32.totalorder %v245, 16
    %v322 = vsel %vm321, %v318, %v320
    %v323 = vsel %vm321, %v320, %v318
    %v324 = vperm.slane %v184, 1
    %v325 = vperm.slane %v185, 1
    %v326 = vmul.f32 %v323, %v324
    %v327 = vmul.f32 %v322, %v325
    %s328 = sld [smem:[#allocation9 + $0x4]]
    %v329 = vstv %s328
    %v330 = vmul.f32 %v326, %v329
    %v331 = vmul.f32 %v327, %v329
    %v334 = vrot.slane %v330, 1
    %v335 = vrot.slane %v331, 1
    %v340 = vadd.f32 %v265, %v330
    %v341 = vadd.f32 %v266, %v331
    %v342 = vadd.f32 %v267, %v334
    %v343 = vadd.f32 %v268, %v335
    %s344 = sld [smem:[#allocation9 + $0x5]]
    %v345 = vstv %s344
    %v346 = vmul.f32 %v326, %v345
    %v347 = vmul.f32 %v327, %v345
    %v350 = vrot.slane %v346, 1
    %v351 = vrot.slane %v347, 1
    %v356 = vadd.f32 %v281, %v346
    %v357 = vadd.f32 %v282, %v347
    %v358 = vadd.f32 %v283, %v350
    %v359 = vadd.f32 %v284, %v351
    %s360 = sld [smem:[#allocation9 + $0x6]]
    %v361 = vstv %s360
    %v362 = vmul.f32 %v326, %v361
    %v363 = vmul.f32 %v327, %v361
    %v366 = vrot.slane %v362, 1
    %v367 = vrot.slane %v363, 1
    %v372 = vadd.f32 %v297, %v362
    %v373 = vadd.f32 %v298, %v363
    %v374 = vadd.f32 %v299, %v366
    %v375 = vadd.f32 %v300, %v367
    %s376 = sld [smem:[#allocation9 + $0x7]]
    %v377 = vstv %s376
    %v378 = vmul.f32 %v326, %v377
    %v379 = vmul.f32 %v327, %v377
    %v382 = vrot.slane %v378, 1
    %v383 = vrot.slane %v379, 1
    %v388 = vadd.f32 %v313, %v378
    %v389 = vadd.f32 %v314, %v379
    %v390 = vadd.f32 %v315, %v382
    %v391 = vadd.f32 %v316, %v383
    %392 = vrot.lane.b32.xlu0 %v236, 15
    %v393 = vpop.permute.xlu0 %392
    %394 = vrot.lane.b32.xlu0 %v237, 15
    %v395 = vpop.permute.xlu0 %394
    %vm396 = vcmp.lt.s32.totalorder %v245, 15
    %v397 = vsel %vm396, %v393, %v395
    %v398 = vsel %vm396, %v395, %v393
    %v399 = vperm.slane %v184, 2
    %v400 = vperm.slane %v185, 2
    %v401 = vmul.f32 %v398, %v399
    %v402 = vmul.f32 %v397, %v400
    %s403 = sld [smem:[#allocation9 + $0x8]]
    %v404 = vstv %s403
    %v405 = vmul.f32 %v401, %v404
    %v406 = vmul.f32 %v402, %v404
    %v409 = vrot.slane %v405, 1
    %v410 = vrot.slane %v406, 1
    %v415 = vadd.f32 %v340, %v405
    %v416 = vadd.f32 %v341, %v406
    %v417 = vadd.f32 %v342, %v409
    %v418 = vadd.f32 %v343, %v410
    %s419 = sld [smem:[#allocation9 + $0x9]]
    %v420 = vstv %s419
    %v421 = vmul.f32 %v401, %v420
    %v422 = vmul.f32 %v402, %v420
    %v425 = vrot.slane %v421, 1
    %v426 = vrot.slane %v422, 1
    %v431 = vadd.f32 %v356, %v421
    %v432 = vadd.f32 %v357, %v422
    %v433 = vadd.f32 %v358, %v425
    %v434 = vadd.f32 %v359, %v426
    %s435 = sld [smem:[#allocation9 + $0xa]]
    %v436 = vstv %s435
    %v437 = vmul.f32 %v401, %v436
    %v438 = vmul.f32 %v402, %v436
    %v441 = vrot.slane %v437, 1
    %v442 = vrot.slane %v438, 1
    %v447 = vadd.f32 %v372, %v437
    %v448 = vadd.f32 %v373, %v438
    %v449 = vadd.f32 %v374, %v441
    %v450 = vadd.f32 %v375, %v442
    %s451 = sld [smem:[#allocation9 + $0xb]]
    %v452 = vstv %s451
    %v453 = vmul.f32 %v401, %v452
    %v454 = vmul.f32 %v402, %v452
    %v457 = vrot.slane %v453, 1
    %v458 = vrot.slane %v454, 1
    %v463 = vadd.f32 %v388, %v453
    %v464 = vadd.f32 %v389, %v454
    %v465 = vadd.f32 %v390, %v457
    %v466 = vadd.f32 %v391, %v458
    %467 = vrot.lane.b32.xlu0 %v236, 1
    %v468 = vpop.permute.xlu0 %467
    %469 = vrot.lane.b32.xlu0 %v237, 1
    %v470 = vpop.permute.xlu0 %469
    %vm471 = vcmp.lt.s32.totalorder %v245, 1
    %v472 = vsel %vm471, %v468, %v470
    %v473 = vsel %vm471, %v470, %v468
    %v474 = vperm.slane %v184, 3
    %v475 = vperm.slane %v185, 3
    %v476 = vmul.f32 %v473, %v474
    %v477 = vmul.f32 %v472, %v475
    %s478 = sld [smem:[#allocation9 + $0xc]]
    %v479 = vstv %s478
    %v480 = vmul.f32 %v476, %v479
    %v481 = vmul.f32 %v477, %v479
    %v484 = vrot.slane %v480, 1
    %v485 = vrot.slane %v481, 1
    %v490 = vadd.f32 %v415, %v480
    %v491 = vadd.f32 %v416, %v481
    %v492 = vadd.f32 %v417, %v484
    %v493 = vadd.f32 %v418, %v485
    %s494 = sld [smem:[#allocation9 + $0xd]]
    %v495 = vstv %s494
    %v496 = vmul.f32 %v476, %v495
    %v497 = vmul.f32 %v477, %v495
    %v500 = vrot.slane %v496, 1
    %v501 = vrot.slane %v497, 1
    %v506 = vadd.f32 %v431, %v496
    %v507 = vadd.f32 %v432, %v497
    %v508 = vadd.f32 %v433, %v500
    %v509 = vadd.f32 %v434, %v501
    %s510 = sld [smem:[#allocation9 + $0xe]]
    %v511 = vstv %s510
    %v512 = vmul.f32 %v476, %v511
    %v513 = vmul.f32 %v477, %v511
    %v516 = vrot.slane %v512, 1
    %v517 = vrot.slane %v513, 1
    %v522 = vadd.f32 %v447, %v512
    %v523 = vadd.f32 %v448, %v513
    %v524 = vadd.f32 %v449, %v516
    %v525 = vadd.f32 %v450, %v517
    %s526 = sld [smem:[#allocation9 + $0xf]]
    %v527 = vstv %s526
    %v528 = vmul.f32 %v476, %v527
    %v529 = vmul.f32 %v477, %v527
    %v532 = vrot.slane %v528, 1
    %v533 = vrot.slane %v529, 1
    %v538 = vadd.f32 %v463, %v528
    %v539 = vadd.f32 %v464, %v529
    %v540 = vadd.f32 %v465, %v532
    %v541 = vadd.f32 %v466, %v533
    %542 = vrot.lane.b32.xlu0 %v236, 127
    %v543 = vpop.permute.xlu0 %542
    %544 = vrot.lane.b32.xlu0 %v237, 127
    %v545 = vpop.permute.xlu0 %544
    %vm546 = vcmp.lt.s32.totalorder %v245, 127
    %v547 = vsel %vm546, %v543, %v545
    %v548 = vsel %vm546, %v545, %v543
    %v549 = vperm.slane %v184, 5
    %v550 = vperm.slane %v185, 5
    %v551 = vmul.f32 %v547, %v549
    %v552 = vmul.f32 %v548, %v550
    %s553 = sld [smem:[#allocation9 + $0x14]]
    %v554 = vstv %s553
    %v555 = vmul.f32 %v551, %v554
    %v556 = vmul.f32 %v552, %v554
    %v559 = vrot.slane %v555, 1
    %v560 = vrot.slane %v556, 1
    %v565 = vadd.f32 %v490, %v555
    %v566 = vadd.f32 %v491, %v556
    %v567 = vadd.f32 %v492, %v559
    %v568 = vadd.f32 %v493, %v560
    %s569 = sld [smem:[#allocation9 + $0x15]]
    %v570 = vstv %s569
    %v571 = vmul.f32 %v551, %v570
    %v572 = vmul.f32 %v552, %v570
    %v575 = vrot.slane %v571, 1
    %v576 = vrot.slane %v572, 1
    %v581 = vadd.f32 %v506, %v571
    %v582 = vadd.f32 %v507, %v572
    %v583 = vadd.f32 %v508, %v575
    %v584 = vadd.f32 %v509, %v576
    %s585 = sld [smem:[#allocation9 + $0x16]]
    %v586 = vstv %s585
    %v587 = vmul.f32 %v551, %v586
    %v588 = vmul.f32 %v552, %v586
    %v591 = vrot.slane %v587, 1
    %v592 = vrot.slane %v588, 1
    %v597 = vadd.f32 %v522, %v587
    %v598 = vadd.f32 %v523, %v588
    %v599 = vadd.f32 %v524, %v591
    %v600 = vadd.f32 %v525, %v592
    %s601 = sld [smem:[#allocation9 + $0x17]]
    %v602 = vstv %s601
    %v603 = vmul.f32 %v551, %v602
    %v604 = vmul.f32 %v552, %v602
    %v607 = vrot.slane %v603, 1
    %v608 = vrot.slane %v604, 1
    %v613 = vadd.f32 %v538, %v603
    %v614 = vadd.f32 %v539, %v604
    %v615 = vadd.f32 %v540, %v607
    %v616 = vadd.f32 %v541, %v608
    %617 = vrot.lane.b32.xlu0 %v236, 113
    %v618 = vpop.permute.xlu0 %617
    %619 = vrot.lane.b32.xlu0 %v237, 113
    %v620 = vpop.permute.xlu0 %619
    %vm621 = vcmp.lt.s32.totalorder %v245, 113
    %v622 = vsel %vm621, %v618, %v620
    %v623 = vsel %vm621, %v620, %v618
    %v624 = vperm.slane %v184, 6
    %v625 = vperm.slane %v185, 6
    %v626 = vmul.f32 %v622, %v624
    %v627 = vmul.f32 %v623, %v625
    %s628 = sld [smem:[#allocation9 + $0x18]]
    %v629 = vstv %s628
    %v630 = vmul.f32 %v626, %v629
    %v631 = vmul.f32 %v627, %v629
    %v634 = vrot.slane %v630, 1
    %v635 = vrot.slane %v631, 1
    %v640 = vadd.f32 %v565, %v630
    %v641 = vadd.f32 %v566, %v631
    %v642 = vadd.f32 %v567, %v634
    %v643 = vadd.f32 %v568, %v635
    %s644 = sld [smem:[#allocation9 + $0x19]]
    %v645 = vstv %s644
    %v646 = vmul.f32 %v626, %v645
    %v647 = vmul.f32 %v627, %v645
    %v650 = vrot.slane %v646, 1
    %v651 = vrot.slane %v647, 1
    %v656 = vadd.f32 %v581, %v646
    %v657 = vadd.f32 %v582, %v647
    %v658 = vadd.f32 %v583, %v650
    %v659 = vadd.f32 %v584, %v651
    %s660 = sld [smem:[#allocation9 + $0x1a]]
    %v661 = vstv %s660
    %v662 = vmul.f32 %v626, %v661
    %v663 = vmul.f32 %v627, %v661
    %v666 = vrot.slane %v662, 1
    %v667 = vrot.slane %v663, 1
    %v672 = vadd.f32 %v597, %v662
    %v673 = vadd.f32 %v598, %v663
    %v674 = vadd.f32 %v599, %v666
    %v675 = vadd.f32 %v600, %v667
    %s676 = sld [smem:[#allocation9 + $0x1b]]
    %v677 = vstv %s676
    %v678 = vmul.f32 %v626, %v677
    %v679 = vmul.f32 %v627, %v677
    %v682 = vrot.slane %v678, 1
    %v683 = vrot.slane %v679, 1
    %v688 = vadd.f32 %v613, %v678
    %v689 = vadd.f32 %v614, %v679
    %v690 = vadd.f32 %v615, %v682
    %v691 = vadd.f32 %v616, %v683
    %692 = vrot.lane.b32.xlu0 %v236, 112
    %v693 = vpop.permute.xlu0 %692
    %694 = vrot.lane.b32.xlu0 %v237, 112
    %v695 = vpop.permute.xlu0 %694
    %vm696 = vcmp.lt.s32.totalorder %v245, 112
    %v697 = vsel %vm696, %v693, %v695
    %v698 = vsel %vm696, %v695, %v693
    %v699 = vperm.slane %v184, 7
    %v700 = vperm.slane %v185, 7
    %v701 = vmul.f32 %v697, %v699
    %v702 = vmul.f32 %v698, %v700
    %s703 = sld [smem:[#allocation9 + $0x1c]]
    %v704 = vstv %s703
    %v705 = vmul.f32 %v701, %v704
    %v706 = vmul.f32 %v702, %v704
    %v709 = vrot.slane %v705, 1
    %v710 = vrot.slane %v706, 1
    %v715 = vadd.f32 %v640, %v705
    %v716 = vadd.f32 %v641, %v706
    %v717 = vadd.f32 %v642, %v709
    %v718 = vadd.f32 %v643, %v710
    %s719 = sld [smem:[#allocation9 + $0x1d]]
    %v720 = vstv %s719
    %v721 = vmul.f32 %v701, %v720
    %v722 = vmul.f32 %v702, %v720
    %v725 = vrot.slane %v721, 1
    %v726 = vrot.slane %v722, 1
    %v731 = vadd.f32 %v656, %v721
    %v732 = vadd.f32 %v657, %v722
    %v733 = vadd.f32 %v658, %v725
    %v734 = vadd.f32 %v659, %v726
    %s735 = sld [smem:[#allocation9 + $0x1e]]
    %v736 = vstv %s735
    %v737 = vmul.f32 %v701, %v736
    %v738 = vmul.f32 %v702, %v736
    %v741 = vrot.slane %v737, 1
    %v742 = vrot.slane %v738, 1
    %v747 = vadd.f32 %v672, %v737
    %v748 = vadd.f32 %v673, %v738
    %v749 = vadd.f32 %v674, %v741
    %v750 = vadd.f32 %v675, %v742
    %s751 = sld [smem:[#allocation9 + $0x1f]]
    %v752 = vstv %s751
    %v753 = vmul.f32 %v701, %v752
    %v754 = vmul.f32 %v702, %v752
    %v757 = vrot.slane %v753, 1
    %v758 = vrot.slane %v754, 1
    %v763 = vadd.f32 %v688, %v753
    %v764 = vadd.f32 %v689, %v754
    %v765 = vadd.f32 %v690, %v757
    %v766 = vadd.f32 %v691, %v758
    %767 = vrot.lane.b32.xlu0 %v236, 111
    %v768 = vpop.permute.xlu0 %767
    %769 = vrot.lane.b32.xlu0 %v237, 111
    %v770 = vpop.permute.xlu0 %769
    %vm771 = vcmp.lt.s32.totalorder %v245, 111
    %v772 = vsel %vm771, %v768, %v770
    %v773 = vsel %vm771, %v770, %v768
    %v774 = vperm.slane %v186, 0
    %v775 = vperm.slane %v187, 0
    %v776 = vmul.f32 %v772, %v774
    %v777 = vmul.f32 %v773, %v775
    %s778 = sld [smem:[#allocation9 + $0x20]]
    %v779 = vstv %s778
    %v780 = vmul.f32 %v776, %v779
    %v781 = vmul.f32 %v777, %v779
    %v784 = vrot.slane %v780, 1
    %v785 = vrot.slane %v781, 1
    %v790 = vadd.f32 %v715, %v780
    %v791 = vadd.f32 %v716, %v781
    %v792 = vadd.f32 %v717, %v784
    %v793 = vadd.f32 %v718, %v785
    %s794 = sld [smem:[#allocation9 + $0x21]]
    %v795 = vstv %s794
    %v796 = vmul.f32 %v776, %v795
    %v797 = vmul.f32 %v777, %v795
    %v800 = vrot.slane %v796, 1
    %v801 = vrot.slane %v797, 1
    %v806 = vadd.f32 %v731, %v796
    %v807 = vadd.f32 %v732, %v797
    %v808 = vadd.f32 %v733, %v800
    %v809 = vadd.f32 %v734, %v801
    %s810 = sld [smem:[#allocation9 + $0x22]]
    %v811 = vstv %s810
    %v812 = vmul.f32 %v776, %v811
    %v813 = vmul.f32 %v777, %v811
    %v816 = vrot.slane %v812, 1
    %v817 = vrot.slane %v813, 1
    %v822 = vadd.f32 %v747, %v812
    %v823 = vadd.f32 %v748, %v813
    %v824 = vadd.f32 %v749, %v816
    %v825 = vadd.f32 %v750, %v817
    %s826 = sld [smem:[#allocation9 + $0x23]]
    %v827 = vstv %s826
    %v828 = vmul.f32 %v776, %v827
    %v829 = vmul.f32 %v777, %v827
    %v832 = vrot.slane %v828, 1
    %v833 = vrot.slane %v829, 1
    %v838 = vadd.f32 %v763, %v828
    %v839 = vadd.f32 %v764, %v829
    %v840 = vadd.f32 %v765, %v832
    %v841 = vadd.f32 %v766, %v833
    %v846 = vrot.slane %v791, 6
    %v847 = vrot.slane %v793, 6
    %v848 = vsel %vm166, %v790, %v846
    %v849 = vsel %vm166, %v792, %v847
    %v850 = vsel %vm169, %v848, %v848
    %v851 = vsel %vm171, %v848, %v850
    %v852 = vrot.slane %v849, 7
    %v853 = vsel %vm174, %v852, %v851
    %v854 = vsel %vm176, %v852, %v853
    %v855 = vsel %vm178, %v852, %v854
    %v856 = vsel %vm180, %v852, %v855
    %858 = vst [vmem:[#allocation12] sm:$0xf] %v856
    %v863 = vrot.slane %v807, 6
    %v864 = vrot.slane %v809, 6
    %v865 = vsel %vm166, %v806, %v863
    %v866 = vsel %vm166, %v808, %v864
    %v867 = vsel %vm169, %v865, %v865
    %v868 = vsel %vm171, %v865, %v867
    %v869 = vrot.slane %v866, 7
    %v870 = vsel %vm174, %v869, %v868
    %v871 = vsel %vm176, %v869, %v870
    %v872 = vsel %vm178, %v869, %v871
    %v873 = vsel %vm180, %v869, %v872
    %875 = vst [vmem:[#allocation12 + $0x4] sm:$0xf] %v873
    %v880 = vrot.slane %v823, 6
    %v881 = vrot.slane %v825, 6
    %v882 = vsel %vm166, %v822, %v880
    %v883 = vsel %vm166, %v824, %v881
    %v884 = vsel %vm169, %v882, %v882
    %v885 = vsel %vm171, %v882, %v884
    %v886 = vrot.slane %v883, 7
    %v887 = vsel %vm174, %v886, %v885
    %v888 = vsel %vm176, %v886, %v887
    %v889 = vsel %vm178, %v886, %v888
    %v890 = vsel %vm180, %v886, %v889
    %892 = vst [vmem:[#allocation12 + $0x8] sm:$0xf] %v890
    %v897 = vrot.slane %v839, 6
    %v898 = vrot.slane %v841, 6
    %v899 = vsel %vm166, %v838, %v897
    %v900 = vsel %vm166, %v840, %v898
    %v901 = vsel %vm169, %v899, %v899
    %v902 = vsel %vm171, %v899, %v901
    %v903 = vrot.slane %v900, 7
    %v904 = vsel %vm174, %v903, %v902
    %v905 = vsel %vm176, %v903, %v904
    %v906 = vsel %vm178, %v903, %v905
    %v907 = vsel %vm180, %v903, %v906
    %909 = vst [vmem:[#allocation12 + $0xc] sm:$0xf] %v907
    // Predicated region
    $region42: #{tpu_custom_call.1} parent=1 // pred_check
      _
    $region43: #{tpu_custom_call.1} parent=1 // pred_check_branch
      %911 = sbr.rel (0) target = $region45
    $region44: #{tpu_custom_call.1} parent=1 // pred_region
      %913 = vsyncadd [#allocation4], 0
      %s915 = sshll.u32 [#allocation12], 4
      %s916 = int_to_ptr.vmem [resolvable:$true] %s915
      %s917 = sshll.u32 %s5, 4
      %s918 = int_to_ptr.hbm [resolvable:$true] %s917
      %920 = dma.vmem_to_hbm [thread:$0]  %s916, 256, %s918, [#allocation4]
    $region45: #{tpu_custom_call.1} parent=1 // pred_fallthru
      _
    // Predicated region
    $region46: #{tpu_custom_call.1} parent=1 // pred_check
      _
    $region47: #{tpu_custom_call.1} parent=1 // pred_check_branch
      %922 = sbr.rel (0) target = $region49
    $region48: #{tpu_custom_call.1} parent=1 // pred_region
      %924 = vsyncadd [#allocation14], 0
      %s926 = sshll.u32 [#allocation13], 4
      %s927 = int_to_ptr.vmem [resolvable:$true] %s926
      %s928 = sshll.u32 %s6, 4
      %s929 = int_to_ptr.hbm [resolvable:$true] %s928
      %931 = dma.vmem_to_hbm [thread:$0]  %s927, 64, %s929, [#allocation14]
    $region49: #{tpu_custom_call.1} parent=1 // pred_fallthru
      _
    // Predicated region
    $region50: #{tpu_custom_call.1} parent=1 // pred_check
      _
    $region51: #{tpu_custom_call.1} parent=1 // pred_check_branch
      %933 = sbr.rel (0) target = $region53
    $region52: #{tpu_custom_call.1} parent=1 // pred_region
      %935 = dma.done [#allocation4], 256
    $region53: #{tpu_custom_call.1} parent=1 // pred_fallthru
      _
    // Predicated region
    $region54: #{tpu_custom_call.1} parent=1 // pred_check
      _
    $region55: #{tpu_custom_call.1} parent=1 // pred_check_branch
      %937 = sbr.rel (0) target = $region57
    $region56: #{tpu_custom_call.1} parent=1 // pred_region
      %939 = dma.done [#allocation14], 64
    $region57: #{tpu_custom_call.1} parent=1 // pred_fallthru
      _
    %940 = vsyncpa [#allocation3], 1
    %941 = vsyncpa [#allocation7], 1
    %942 = vsyncpa [#allocation4], 1
    %943 = vsyncpa [#allocation14], 1
    %944 = vsyncpa [#allocation5], 1
    %945 = vsyncpa [#allocation11], 1

</llo_original>
